<compile_context>
chip_gen: v7x
topology: tpu7x:2x2x1
jax: 0.10.0
libtpu: 0.0.40
codegen_flags: <defaults>
</compile_context>

<pallas_src>
import numpy as np
import jax
import jax.numpy as jnp
from jax import lax
from jax.experimental import pallas as pl
from jax.experimental.pallas import tpu as pltpu

# ---- model hyperparams (small demo sizes consistent with the module) ----
BATCH = 2
SEQ_LEN = 8
VOCAB = 50
VOCAB_PAD = 64                   # one-hot contraction depth (pad 50 -> 64)
EMBED = 32                       # embed_size (default 300, shrunk for demo)
KERNEL_DIM = 16                  # filters per kernel size (default 100, shrunk)
KERNEL_SIZES = (2, 3, 4)
K_MAX = max(KERNEL_SIZES)
NUM_CONVS = len(KERNEL_SIZES)
NUM_CLASSES = 2
CONV_OUT = NUM_CONVS * KERNEL_DIM            # 48  = [f2 | f3 | f4]
FC_IN = 2 * CONV_OUT                         # 96  = [q2 q3 q4 | d2 d3 d4]
OUT_PAD = 128                                # lane-padded FC output width
ROWS = 2 * BATCH * SEQ_LEN                   # 32 flattened token rows (query||doc)
ROWS_PAD = ((ROWS + K_MAX - 1 + 7) // 8) * 8  # 40 (room for shifted windows)

# Static temporal-validity mask: column block c uses kernel size KERNEL_SIZES[c],
# valid positions t <= L - k. Compile-time constant, passed as a tiny VMEM input.
_T = np.arange(ROWS) % SEQ_LEN
_K = np.repeat(np.asarray(KERNEL_SIZES, np.int32), KERNEL_DIM)
_TEMPORAL_MASK = (_T[:, None] <= (SEQ_LEN - _K)[None, :]).astype(np.float32)


def _textcnn_kernel(ids_ref, emb_ref, wconv_ref, bconv_ref, mask_ref,
                    fcw_ref, fcb_ref, out_ref):
    # ---- 1) embedding gather as ONE one-hot MXU matmul.
    # ids: query rows [0, B*L), doc rows [B*L, 2B*L), pad rows have id = -1.
    lane = lax.broadcasted_iota(jnp.int32, (ROWS_PAD, VOCAB_PAD), 1)
    onehot = (lane == ids_ref[...]).astype(jnp.bfloat16)          # (ROWS_PAD, VOCAB_PAD)
    x = jnp.dot(onehot, emb_ref[...],
                preferred_element_type=jnp.float32)               # (ROWS_PAD, EMBED)

    # ---- 2) all three convs as ONE depth-128 matmul.
    # win[r, j*E + e] = x[r + j, e]  (XLU rolls, no unaligned sublane slices;
    # positive shift ROWS_PAD - j ≡ -j mod ROWS_PAD).
    win = jnp.concatenate(
        [x] + [pltpu.roll(x, ROWS_PAD - j, axis=0) for j in range(1, K_MAX)],
        axis=1)                                                   # (ROWS_PAD, 128)
    s = jnp.dot(win.astype(jnp.bfloat16), wconv_ref[...],
                preferred_element_type=jnp.float32)               # (ROWS_PAD, 3F)
    s = jnp.maximum(s + bconv_ref[...], 0.0)                      # ReLU(conv + bias)

    # ---- 3) static temporal mask (constant multiply) + single sublane max-pool.
    # ReLU >= 0, so zeroing invalid positions keeps the temporal max exact.
    sv = s[:ROWS, :] * mask_ref[...]                              # (ROWS, 3F)
    pooled = jnp.max(sv.reshape(2 * BATCH, SEQ_LEN, CONV_OUT), axis=1)  # (2B, 3F)

    # ---- 4) concat query/doc features along lanes + single FC matmul.
    # (TODO(synk): nn.Dropout is identity at inference; training-mode dropout
    #  via pltpu.prng_random_bits masking not implemented.)
    feats = jnp.concatenate([pooled[:BATCH, :], pooled[BATCH:, :]], axis=1)  # (B, 6F)
    out_ref[...] = (jnp.dot(feats, fcw_ref[...].astype(jnp.float32),
                            preferred_element_type=jnp.float32)
                    + fcb_ref[...])


def init_params(key):
    keys = jax.random.split(key, 8)
    params = {}

    # embedding table (pretrained & frozen in the torch module; synthetic here),
    # padded to VOCAB_PAD rows and stored bf16 (halves HBM->VMEM traffic).
    emb = jax.random.normal(keys[0], (VOCAB, EMBED), jnp.float32)
    params["embedding"] = (jnp.zeros((VOCAB_PAD, EMBED), jnp.float32)
                           .at[:VOCAB].set(emb).astype(jnp.bfloat16))

    # pack the three conv weights/biases into one slab:
    #   w_conv[j*E + e, c*F + f] = conv_c weight at (filter f, time-offset j, embed e)
    #   rows j >= k_c are zero for column block c (neutralizes window overhang).
    w_conv = jnp.zeros((K_MAX * EMBED, CONV_OUT), jnp.float32)
    b_conv = jnp.zeros((1, CONV_OUT), jnp.float32)
    for i, k in enumerate(KERNEL_SIZES):
        wk = 0.1 * jax.random.normal(keys[1 + i], (k * EMBED, KERNEL_DIM), jnp.float32)
        bk = 0.01 * jax.random.normal(keys[4 + i], (1, KERNEL_DIM), jnp.float32)
        w_conv = w_conv.at[:k * EMBED, i * KERNEL_DIM:(i + 1) * KERNEL_DIM].set(wk)
        b_conv = b_conv.at[:, i * KERNEL_DIM:(i + 1) * KERNEL_DIM].set(bk)
    params["w_conv"] = w_conv.astype(jnp.bfloat16)
    params["b_conv"] = b_conv

    # fc: xavier_uniform_(gain=1), bias = 0.1 ; lane-padded to 128 output cols.
    bound = (6.0 / (FC_IN + NUM_CLASSES)) ** 0.5
    fcw = jax.random.uniform(keys[7], (FC_IN, NUM_CLASSES), jnp.float32, -bound, bound)
    params["fc_w"] = (jnp.zeros((FC_IN, OUT_PAD), jnp.float32)
                      .at[:, :NUM_CLASSES].set(fcw).astype(jnp.bfloat16))
    params["fc_b"] = jnp.zeros((1, OUT_PAD), jnp.float32).at[:, :NUM_CLASSES].set(0.1)
    return params


@jax.jit
def forward(params, query_word_input, doc_word_input):
    # flatten + pad token ids to one small int32 column vector (pad ids = -1).
    ids = jnp.concatenate([query_word_input.reshape(-1),
                           doc_word_input.reshape(-1)]).astype(jnp.int32)
    ids = jnp.pad(ids, (0, ROWS_PAD - ROWS), constant_values=-1).reshape(ROWS_PAD, 1)
    mask = jnp.asarray(_TEMPORAL_MASK)

    grid_spec = pltpu.PrefetchScalarGridSpec(
        num_scalar_prefetch=0,
        grid=(1,),
        in_specs=[
            pl.BlockSpec((ROWS_PAD, 1), lambda i: (0, 0)),              # token ids
            pl.BlockSpec((VOCAB_PAD, EMBED), lambda i: (0, 0)),         # embedding (bf16)
            pl.BlockSpec((K_MAX * EMBED, CONV_OUT), lambda i: (0, 0)),  # packed conv W (bf16)
            pl.BlockSpec((1, CONV_OUT), lambda i: (0, 0)),              # packed conv b
            pl.BlockSpec((ROWS, CONV_OUT), lambda i: (0, 0)),           # temporal mask
            pl.BlockSpec((FC_IN, OUT_PAD), lambda i: (0, 0)),           # fc W (bf16, padded)
            pl.BlockSpec((1, OUT_PAD), lambda i: (0, 0)),               # fc b (padded)
        ],
        out_specs=pl.BlockSpec((BATCH, OUT_PAD), lambda i: (0, 0)),
    )

    flops = (2 * ROWS_PAD * VOCAB_PAD * EMBED
             + 2 * ROWS_PAD * (K_MAX * EMBED) * CONV_OUT
             + 2 * BATCH * FC_IN * OUT_PAD)
    bytes_accessed = (4 * ROWS_PAD
                      + 2 * VOCAB_PAD * EMBED
                      + 2 * K_MAX * EMBED * CONV_OUT + 4 * CONV_OUT
                      + 4 * ROWS * CONV_OUT
                      + 2 * FC_IN * OUT_PAD + 4 * OUT_PAD
                      + 4 * BATCH * OUT_PAD)

    out_padded = pl.pallas_call(
        _textcnn_kernel,
        out_shape=jax.ShapeDtypeStruct((BATCH, OUT_PAD), jnp.float32),
        grid_spec=grid_spec,
        compiler_params=pltpu.CompilerParams(
            dimension_semantics=("arbitrary",),
            vmem_limit_bytes=32 * 1024 * 1024),
        cost_estimate=pl.CostEstimate(flops=flops, transcendentals=0,
                                      bytes_accessed=bytes_accessed),
    )(ids, params["embedding"], params["w_conv"], params["b_conv"],
      mask, params["fc_w"], params["fc_b"])

    return out_padded[:, :NUM_CLASSES]


def reference_forward(params, q_idx, d_idx):
    """Pure-JAX mirror of the PyTorch forward (for a correctness check)."""
    emb = params["embedding"].astype(jnp.float32)[:VOCAB]
    w_conv = params["w_conv"].astype(jnp.float32)
    fc_w = params["fc_w"].astype(jnp.float32)[:, :NUM_CLASSES]

    def side(idx):
        x = jnp.take(emb, idx, axis=0)                        # (B, L, E)
        feats = []
        for i, k in enumerate(KERNEL_SIZES):
            wk = w_conv[:k * EMBED, i * KERNEL_DIM:(i + 1) * KERNEL_DIM]
            bk = params["b_conv"][:, i * KERNEL_DIM:(i + 1) * KERNEL_DIM]
            T = SEQ_LEN - k + 1
            wins = jnp.stack(
                [x[:, t:t + k, :].reshape(BATCH, k * EMBED) for t in range(T)], axis=1)
            s = jnp.maximum(jnp.einsum("btc,cf->btf", wins, wk) + bk, 0.0)
            feats.append(jnp.max(s, axis=1))                  # (B, F)
        return jnp.concatenate(feats, axis=-1)                # (B, 3F)

    concat = jnp.concatenate([side(q_idx), side(d_idx)], axis=-1)   # (B, 6F)
    return concat @ fc_w + params["fc_b"][:, :NUM_CLASSES]


if __name__ == "__main__":
    key = jax.random.PRNGKey(0)
    pkey, qkey, dkey = jax.random.split(key, 3)
    params = init_params(pkey)

    query_word_input = jax.random.randint(qkey, (BATCH, SEQ_LEN), 0, VOCAB, jnp.int32)
    doc_word_input = jax.random.randint(dkey, (BATCH, SEQ_LEN), 0, VOCAB, jnp.int32)

    pred = forward(params, query_word_input, doc_word_input)
    jax.block_until_ready(pred)
    assert pred.shape == (BATCH, NUM_CLASSES)

    ref = reference_forward(params, query_word_input, doc_word_input)
    assert jnp.allclose(pred, ref, rtol=1e-3, atol=1e-3), (pred, ref)

    print("KERNEL_OK")
</pallas_src>

<mosaic_0001>
module attributes {stable_mosaic.version = 11 : i64} {
  func.func @_textcnn_kernel(%arg0: i32, %arg1: memref<40x1xi32, #tpu.memory_space<vmem>>, %arg2: memref<64x32xbf16, #tpu.memory_space<vmem>>, %arg3: memref<128x48xbf16, #tpu.memory_space<vmem>>, %arg4: memref<1x48xf32, #tpu.memory_space<vmem>>, %arg5: memref<32x48xf32, #tpu.memory_space<vmem>>, %arg6: memref<96x128xbf16, #tpu.memory_space<vmem>>, %arg7: memref<1x128xf32, #tpu.memory_space<vmem>>, %arg8: memref<2x128xf32, #tpu.memory_space<vmem>>) attributes {dimension_semantics = [#tpu.dimension_semantics<arbitrary>], iteration_bounds = array<i64: 1>, scalar_prefetch = 0 : i64, scratch_operands = 0 : i64, tpu.core_type = #tpu.core_type<tc>, window_params = [{pipeline_mode = #tpu.pipeline_mode<synchronous>, transform_indices = @transform_0, window_bounds = array<i64: 40, 1>}, {pipeline_mode = #tpu.pipeline_mode<synchronous>, transform_indices = @transform_1, window_bounds = array<i64: 64, 32>}, {pipeline_mode = #tpu.pipeline_mode<synchronous>, transform_indices = @transform_2, window_bounds = array<i64: 128, 48>}, {pipeline_mode = #tpu.pipeline_mode<synchronous>, transform_indices = @transform_3, window_bounds = array<i64: 1, 48>}, {pipeline_mode = #tpu.pipeline_mode<synchronous>, transform_indices = @transform_4, window_bounds = array<i64: 32, 48>}, {pipeline_mode = #tpu.pipeline_mode<synchronous>, transform_indices = @transform_5, window_bounds = array<i64: 96, 128>}, {pipeline_mode = #tpu.pipeline_mode<synchronous>, transform_indices = @transform_6, window_bounds = array<i64: 1, 128>}, {pipeline_mode = #tpu.pipeline_mode<synchronous>, transform_indices = @transform_7, window_bounds = array<i64: 2, 128>}]} {
    %0 = tpu.iota {dimensions = array<i32: 1>} : vector<40x64xi32>
    %c0 = arith.constant 0 : index
    %c0_0 = arith.constant 0 : index
    %1 = vector.load %arg1[%c0, %c0_0] : memref<40x1xi32, #tpu.memory_space<vmem>>, vector<40x1xi32>
    %2 = vector.broadcast %1 : vector<40x1xi32> to vector<40x64xi32>
    %3 = arith.cmpi eq, %0, %2 : vector<40x64xi32>
    %4 = arith.extui %3 : vector<40x64xi1> to vector<40x64xi32>
    %5 = arith.sitofp %4 : vector<40x64xi32> to vector<40x64xf32>
    %6 = arith.truncf %5 : vector<40x64xf32> to vector<40x64xbf16>
    %c0_1 = arith.constant 0 : index
    %c0_2 = arith.constant 0 : index
    %7 = vector.load %arg2[%c0_1, %c0_2] : memref<64x32xbf16, #tpu.memory_space<vmem>>, vector<64x32xbf16>
    %cst = arith.constant dense<0.000000e+00> : vector<40x32xf32>
    %8 = tpu.matmul %6, %7, %cst {dimension_numbers = #tpu.dot_dimension_numbers<[1], [0], [0], [1], [0, 0, 1, 1], [], []>} : vector<40x64xbf16>, vector<64x32xbf16>, vector<40x32xf32> -> vector<40x32xf32>
    %c39_i32 = arith.constant 39 : i32
    %9 = tpu.dynamic_rotate %8 by %c39_i32 dim 0 : vector<40x32xf32>, i32 -> vector<40x32xf32>
    %c38_i32 = arith.constant 38 : i32
    %10 = tpu.dynamic_rotate %8 by %c38_i32 dim 0 : vector<40x32xf32>, i32 -> vector<40x32xf32>
    %c37_i32 = arith.constant 37 : i32
    %11 = tpu.dynamic_rotate %8 by %c37_i32 dim 0 : vector<40x32xf32>, i32 -> vector<40x32xf32>
    %12 = tpu.concatenate %8, %9, %10, %11 in 1 : vector<40x32xf32>, vector<40x32xf32>, vector<40x32xf32>, vector<40x32xf32> -> vector<40x128xf32>
    %13 = arith.truncf %12 : vector<40x128xf32> to vector<40x128xbf16>
    %c0_3 = arith.constant 0 : index
    %c0_4 = arith.constant 0 : index
    %14 = vector.load %arg3[%c0_3, %c0_4] : memref<128x48xbf16, #tpu.memory_space<vmem>>, vector<128x48xbf16>
    %cst_5 = arith.constant dense<0.000000e+00> : vector<40x48xf32>
    %15 = tpu.matmul %13, %14, %cst_5 {dimension_numbers = #tpu.dot_dimension_numbers<[1], [0], [0], [1], [0, 0, 1, 1], [], []>} : vector<40x128xbf16>, vector<128x48xbf16>, vector<40x48xf32> -> vector<40x48xf32>
    %c0_6 = arith.constant 0 : index
    %c0_7 = arith.constant 0 : index
    %16 = vector.load %arg4[%c0_6, %c0_7] : memref<1x48xf32, #tpu.memory_space<vmem>>, vector<1x48xf32>
    %17 = vector.broadcast %16 : vector<1x48xf32> to vector<40x48xf32>
    %18 = arith.addf %15, %17 : vector<40x48xf32>
    %cst_8 = arith.constant 0.000000e+00 : f32
    %19 = vector.broadcast %cst_8 : f32 to vector<40x48xf32>
    %20 = arith.maximumf %18, %19 : vector<40x48xf32>
    %21 = vector.extract_strided_slice %20 {offsets = [0, 0], sizes = [32, 48], strides = [1, 1]} : vector<40x48xf32> to vector<32x48xf32>
    %c0_9 = arith.constant 0 : index
    %c0_10 = arith.constant 0 : index
    %22 = vector.load %arg5[%c0_9, %c0_10] : memref<32x48xf32, #tpu.memory_space<vmem>>, vector<32x48xf32>
    %23 = arith.mulf %21, %22 : vector<32x48xf32>
    %24 = vector.shape_cast %23 : vector<32x48xf32> to vector<4x8x48xf32>
    %cst_11 = arith.constant dense<0xFF800000> : vector<4x48xf32>
    %25 = vector.multi_reduction <maximumf>, %24, %cst_11 [1] : vector<4x8x48xf32> to vector<4x48xf32>
    %26 = vector.extract_strided_slice %25 {offsets = [0, 0], sizes = [2, 48], strides = [1, 1]} : vector<4x48xf32> to vector<2x48xf32>
    %27 = vector.extract_strided_slice %25 {offsets = [2, 0], sizes = [2, 48], strides = [1, 1]} : vector<4x48xf32> to vector<2x48xf32>
    %28 = tpu.concatenate %26, %27 in 1 : vector<2x48xf32>, vector<2x48xf32> -> vector<2x96xf32>
    %c0_12 = arith.constant 0 : index
    %c0_13 = arith.constant 0 : index
    %29 = vector.load %arg6[%c0_12, %c0_13] : memref<96x128xbf16, #tpu.memory_space<vmem>>, vector<96x128xbf16>
    %30 = arith.extf %29 : vector<96x128xbf16> to vector<96x128xf32>
    %cst_14 = arith.constant dense<0.000000e+00> : vector<2x128xf32>
    %31 = tpu.matmul %28, %30, %cst_14 {dimension_numbers = #tpu.dot_dimension_numbers<[1], [0], [0], [1], [0, 0, 1, 1], [], []>} : vector<2x96xf32>, vector<96x128xf32>, vector<2x128xf32> -> vector<2x128xf32>
    %c0_15 = arith.constant 0 : index
    %c0_16 = arith.constant 0 : index
    %32 = vector.load %arg7[%c0_15, %c0_16] : memref<1x128xf32, #tpu.memory_space<vmem>>, vector<1x128xf32>
    %33 = vector.broadcast %32 : vector<1x128xf32> to vector<2x128xf32>
    %34 = arith.addf %31, %33 : vector<2x128xf32>
    %c0_17 = arith.constant 0 : index
    %c0_18 = arith.constant 0 : index
    %35 = vector.load %arg8[%c0_17, %c0_18] : memref<2x128xf32, #tpu.memory_space<vmem>>, vector<2x128xf32>
    tpu.vector_store %arg8[%c0_17, %c0_18], %34 {strides = array<i32>} : memref<2x128xf32, #tpu.memory_space<vmem>>, vector<2x128xf32>,
    return
  }
  func.func @transform_0(%arg0: i32) -> (i32, i32) {
    %c0_i32 = arith.constant 0 : i32
    %c0_i32_0 = arith.constant 0 : i32
    %c0_i32_1 = arith.constant 0 : i32
    return %c0_i32, %c0_i32_0 : i32, i32
  }
  func.func @transform_1(%arg0: i32) -> (i32, i32) {
    %c0_i32 = arith.constant 0 : i32
    %c0_i32_0 = arith.constant 0 : i32
    %c0_i32_1 = arith.constant 0 : i32
    return %c0_i32, %c0_i32_0 : i32, i32
  }
  func.func @transform_2(%arg0: i32) -> (i32, i32) {
    %c0_i32 = arith.constant 0 : i32
    %c0_i32_0 = arith.constant 0 : i32
    %c0_i32_1 = arith.constant 0 : i32
    return %c0_i32, %c0_i32_0 : i32, i32
  }
  func.func @transform_3(%arg0: i32) -> (i32, i32) {
    %c0_i32 = arith.constant 0 : i32
    %c0_i32_0 = arith.constant 0 : i32
    %c0_i32_1 = arith.constant 0 : i32
    return %c0_i32, %c0_i32_0 : i32, i32
  }
  func.func @transform_4(%arg0: i32) -> (i32, i32) {
    %c0_i32 = arith.constant 0 : i32
    %c0_i32_0 = arith.constant 0 : i32
    %c0_i32_1 = arith.constant 0 : i32
    return %c0_i32, %c0_i32_0 : i32, i32
  }
  func.func @transform_5(%arg0: i32) -> (i32, i32) {
    %c0_i32 = arith.constant 0 : i32
    %c0_i32_0 = arith.constant 0 : i32
    %c0_i32_1 = arith.constant 0 : i32
    return %c0_i32, %c0_i32_0 : i32, i32
  }
  func.func @transform_6(%arg0: i32) -> (i32, i32) {
    %c0_i32 = arith.constant 0 : i32
    %c0_i32_0 = arith.constant 0 : i32
    %c0_i32_1 = arith.constant 0 : i32
    return %c0_i32, %c0_i32_0 : i32, i32
  }
  func.func @transform_7(%arg0: i32) -> (i32, i32) {
    %c0_i32 = arith.constant 0 : i32
    %c0_i32_0 = arith.constant 0 : i32
    %c0_i32_1 = arith.constant 0 : i32
    return %c0_i32, %c0_i32_0 : i32, i32
  }
}

</mosaic_0001>

<llo_original>
// kernel: forward.1
$region0: #{forward.1}
  #allocation0 [shape = 'u32[]', space=smem, size = 0x4, offset = 0x4, fixed_abs, tag = 'smem constant byte address 0x4 - core index']
  #allocation1 [shape = 'u32[144,128]{1,0:T(1,128)}', space=vmem, size = 0x12000, scoped, tag = 'internal scratch']
  %s0 = inlined_call_operand.vmem [shape: s32[40,1], index: 0, kind: input, shape index: {}]
  %s1 = inlined_call_operand.vmem [shape: bf16[64,32], index: 1, kind: input, shape index: {}]
  %s2 = inlined_call_operand.vmem [shape: bf16[128,48], index: 2, kind: input, shape index: {}]
  %s3 = inlined_call_operand.vmem [shape: f32[1,48], index: 3, kind: input, shape index: {}]
  %s4 = inlined_call_operand.vmem [shape: f32[32,48], index: 4, kind: input, shape index: {}]
  %s5 = inlined_call_operand.vmem [shape: bf16[96,128], index: 5, kind: input, shape index: {}]
  %s6 = inlined_call_operand.vmem [shape: f32[1,128], index: 6, kind: input, shape index: {}]
  %s7 = inlined_call_operand.hbm [shape: f32[2,128], index: 7, kind: output, shape index: {}]
  %s8 = sld [smem:[#allocation0]]
  $region38: #{forward.1} parent=0
    _
  %s10 = ssub.s32 1, %s8
  %s11 = scalar_select 0, %s10, %s8
  $region1: #{forward.1} parent=0
    #allocation2 [shape = 'u8[1024]{0}', space=vmem, size = 0x400, scoped, tag = 'output window, operand 0, single buffered']
    #allocation3 [shape = 's32[1]{0}', space=sflag, size = 0x4, scoped, tag = 'scoped memory for forward.1']
    %12 = vsyncpa [#allocation3], 0
    // Predicated region
    $region2: #{forward.1} parent=1 // pred_check
      _
    $region3: #{forward.1} parent=1 // pred_check_branch
      %14 = sbr.rel (0) target = $region5
    $region4: #{forward.1} parent=1 // pred_region
      _
    $region5: #{forward.1} parent=1 // pred_fallthru
      _
    // Predicated region
    $region6: #{forward.1} parent=1 // pred_check
      _
    $region7: #{forward.1} parent=1 // pred_check_branch
      %16 = sbr.rel (0) target = $region9
    $region8: #{forward.1} parent=1 // pred_region
      _
    $region9: #{forward.1} parent=1 // pred_fallthru
      _
    // Predicated region
    $region10: #{forward.1} parent=1 // pred_check
      _
    $region11: #{forward.1} parent=1 // pred_check_branch
      %18 = sbr.rel (0) target = $region13
    $region12: #{forward.1} parent=1 // pred_region
      _
    $region13: #{forward.1} parent=1 // pred_fallthru
      _
    // Predicated region
    $region14: #{forward.1} parent=1 // pred_check
      _
    $region15: #{forward.1} parent=1 // pred_check_branch
      %20 = sbr.rel (0) target = $region17
    $region16: #{forward.1} parent=1 // pred_region
      _
    $region17: #{forward.1} parent=1 // pred_fallthru
      _
    // Predicated region
    $region18: #{forward.1} parent=1 // pred_check
      _
    $region19: #{forward.1} parent=1 // pred_check_branch
      %22 = sbr.rel (0) target = $region21
    $region20: #{forward.1} parent=1 // pred_region
      _
    $region21: #{forward.1} parent=1 // pred_fallthru
      _
    // Predicated region
    $region22: #{forward.1} parent=1 // pred_check
      _
    $region23: #{forward.1} parent=1 // pred_check_branch
      %24 = sbr.rel (0) target = $region25
    $region24: #{forward.1} parent=1 // pred_region
      _
    $region25: #{forward.1} parent=1 // pred_fallthru
      _
    // Predicated region
    $region26: #{forward.1} parent=1 // pred_check
      _
    $region27: #{forward.1} parent=1 // pred_check_branch
      %26 = sbr.rel (0) target = $region29
    $region28: #{forward.1} parent=1 // pred_region
      _
    $region29: #{forward.1} parent=1 // pred_fallthru
      _
    %v28 = vlaneseq
    %v29 = vand.u32 %v28, 127
    %v30 = vld [vmem:[%s0] sm:$0xff]
    %v31 = vld [vmem:[%s0 + $0x8] sm:$0xff]
    %v32 = vld [vmem:[%s0 + $0x10] sm:$0xff]
    %v33 = vld [vmem:[%s0 + $0x18] sm:$0xff]
    %v34 = vld [vmem:[%s0 + $0x20] sm:$0xff]
    %35 = vset.pattern.permute.xlu0 0
    %36 = vperm.xlu0 %35, %v30
    %v37 = vpop.permute.xlu0 %36
    %38 = vset.pattern.permute.xlu0 0
    %39 = vperm.xlu0 %38, %v31
    %v40 = vpop.permute.xlu0 %39
    %41 = vset.pattern.permute.xlu0 0
    %42 = vperm.xlu0 %41, %v32
    %v43 = vpop.permute.xlu0 %42
    %44 = vset.pattern.permute.xlu0 0
    %45 = vperm.xlu0 %44, %v33
    %v46 = vpop.permute.xlu0 %45
    %47 = vset.pattern.permute.xlu0 0
    %48 = vperm.xlu0 %47, %v34
    %v49 = vpop.permute.xlu0 %48
    %vm50 = vcmp.eq.s32.totalorder %v29, %v37
    %vm51 = vcmp.eq.s32.totalorder %v29, %v40
    %vm52 = vcmp.eq.s32.totalorder %v29, %v43
    %vm53 = vcmp.eq.s32.totalorder %v29, %v46
    %vm54 = vcmp.eq.s32.totalorder %v29, %v49
    %v55 = vsel %vm50, 1, 0
    %v56 = vsel %vm51, 1, 0
    %v57 = vsel %vm52, 1, 0
    %v58 = vsel %vm53, 1, 0
    %v59 = vsel %vm54, 1, 0
    %v60 = vcvt.s32.f32 %v55
    %v61 = vcvt.s32.f32 %v56
    %v62 = vcvt.s32.f32 %v57
    %v63 = vcvt.s32.f32 %v58
    %v64 = vcvt.s32.f32 %v59
    %v65 = vpack.c.bf16 %v61, %v60
    %v66 = vpack.c.bf16 %v63, %v62
    %v67 = vpack.c.bf16 %v64, %v64
    %v68 = vld [vmem:[%s1] sm:$0xf]
    %v69 = vld [vmem:[%s1 + $0x4] sm:$0xf]
    %v70 = vld [vmem:[%s1 + $0x8] sm:$0xf]
    %v71 = vld [vmem:[%s1 + $0xc] sm:$0xf]
    %v72 = vld [vmem:[%s1 + $0x10] sm:$0xf]
    %v73 = vld [vmem:[%s1 + $0x14] sm:$0xf]
    %v74 = vld [vmem:[%s1 + $0x18] sm:$0xf]
    %v75 = vld [vmem:[%s1 + $0x1c] sm:$0xf]
    %v84 = vunpack.c.l.b16 %v68
    %v85 = vunpack.c.l.b16 %v69
    %v86 = vunpack.c.l.b16 %v70
    %v87 = vunpack.c.l.b16 %v71
    %v88 = vunpack.c.l.b16 %v72
    %v89 = vunpack.c.l.b16 %v73
    %v90 = vunpack.c.l.b16 %v74
    %v91 = vunpack.c.l.b16 %v75
    %v92 = vpack.c.b16 %v85, %v84
    %v93 = vpack.c.b16 %v87, %v86
    %v94 = vpack.c.b16 %v89, %v88
    %v95 = vpack.c.b16 %v91, %v90
    %vm100 = vcmask 523264
    %v102 = vsel %vm100, %v65, 0
    %v105 = vsel %vm100, %v66, 0
    %v108 = vsel %vm100, %v67, 0
    %110 = vmatprep.subr.bf16.mxu0 0
    %111 = vmatpush1.bf16.msra.mxu0 %v92
    %112 = vmatprep.subr.bf16.mxu0 0
    %113 = vmatpush1.bf16.msra.mxu0 %v93
    %114 = vmatprep.subr.bf16.mxu0 0
    %115 = vmatpush1.bf16.msra.mxu0 %v94
    %116 = vmatprep.subr.bf16.mxu0 0
    %117 = vmatpush1.bf16.msra.mxu0 %v95
    %118 = vmatprep.subr.bf16.mxu0 0
    %119 = vmatpush1.bf16.msra.mxu0 0
    %120 = vmatprep.subr.bf16.mxu0 0
    %121 = vmatpush1.bf16.msra.mxu0 0
    %122 = vmatprep.subr.bf16.mxu0 0
    %123 = vmatpush1.bf16.msra.mxu0 0
    %124 = vmatprep.subr.bf16.mxu0 0
    %125 = vmatpush1.bf16.msra.mxu0 0
    %126 = vmatprep.subr.bf16.mxu0 0
    %127 = vmatpush1.bf16.msra.mxu0 0
    %128 = vmatprep.subr.bf16.mxu0 0
    %129 = vmatpush1.bf16.msra.mxu0 0
    %130 = vmatprep.subr.bf16.mxu0 0
    %131 = vmatpush1.bf16.msra.mxu0 0
    %132 = vmatprep.subr.bf16.mxu0 0
    %133 = vmatpush1.bf16.msra.mxu0 0
    %134 = vmatprep.subr.bf16.mxu0 0
    %135 = vmatpush1.bf16.msra.mxu0 0
    %136 = vmatprep.subr.bf16.mxu0 0
    %137 = vmatpush1.bf16.msra.mxu0 0
    %138 = vmatprep.subr.bf16.mxu0 0
    %139 = vmatpush1.bf16.msra.mxu0 0
    %140 = vmatprep.subr.bf16.mxu0 0
    %141 = vmatpush1.bf16.msra.mxu0 0
    %142 = vmatprep.mubr.bf16.mxu0 0
    %143 = vmatmul.mubr.bf16.gmra.mrb[0].mxu0 %v102
    %v144 = vpop.f32.mrb[0].mxu0
    %v145 = vadd.f32 0.0, %v144
    %v146 = vpop.f32.mrb[0].mxu0
    %v147 = vpop.f32.mrb[0].mxu0
    %v148 = vadd.f32 0.0, %v147
    %v149 = vpop.f32.mrb[0].mxu0
    %150 = vmatprep.mubr.bf16.mxu0 0
    %151 = vmatmul.mubr.bf16.gmra.mrb[0].mxu0 %v105
    %v152 = vpop.f32.mrb[0].mxu0
    %v153 = vadd.f32 0.0, %v152
    %v154 = vpop.f32.mrb[0].mxu0
    %v155 = vpop.f32.mrb[0].mxu0
    %v156 = vadd.f32 0.0, %v155
    %v157 = vpop.f32.mrb[0].mxu0
    %158 = vmatprep.mubr.bf16.mxu0 0
    %159 = vmatmul.mubr.bf16.gmra.mrb[0].mxu0 %v108
    %v160 = vpop.f32.mrb[0].mxu0
    %v161 = vadd.f32 0.0, %v160
    %v162 = vpop.f32.mrb[0].mxu0
    %v163 = vpop.f32.mrb[0].mxu0
    %v164 = vpop.f32.mrb[0].mxu0
    %165 = vdwg.mxu0
    %v166 = vrot.slane %v145, 1
    %v167 = vrot.slane %v148, 1
    %v168 = vrot.slane %v153, 1
    %v169 = vrot.slane %v156, 1
    %v170 = vrot.slane %v161, 1
    %v171 = vlaneseq
    %v172 = vshrl.u32 %v171, 7
    %vm173 = vcmp.lt.s32.totalorder %v172, 7
    %v174 = vsel %vm173, %v169, %v170
    %v175 = vsel %vm173, %v168, %v169
    %v176 = vsel %vm173, %v167, %v168
    %v177 = vsel %vm173, %v166, %v167
    %v178 = vsel %vm173, %v170, %v166
    %v179 = vrot.slane %v145, 2
    %v180 = vrot.slane %v148, 2
    %v181 = vrot.slane %v153, 2
    %v182 = vrot.slane %v156, 2
    %v183 = vrot.slane %v161, 2
    %vm184 = vcmp.lt.s32.totalorder %v172, 6
    %v185 = vsel %vm184, %v182, %v183
    %v186 = vsel %vm184, %v181, %v182
    %v187 = vsel %vm184, %v180, %v181
    %v188 = vsel %vm184, %v179, %v180
    %v189 = vsel %vm184, %v183, %v179
    %v190 = vrot.slane %v145, 3
    %v191 = vrot.slane %v148, 3
    %v192 = vrot.slane %v153, 3
    %v193 = vrot.slane %v156, 3
    %v194 = vrot.slane %v161, 3
    %vm195 = vcmp.lt.s32.totalorder %v172, 5
    %v196 = vsel %vm195, %v193, %v194
    %v197 = vsel %vm195, %v192, %v193
    %v198 = vsel %vm195, %v191, %v192
    %v199 = vsel %vm195, %v190, %v191
    %v200 = vsel %vm195, %v194, %v190
    %206 = vrot.lane.b32.xlu0 %v177, 32
    %v207 = vpop.permute.xlu0 %206
    %208 = vrot.lane.b32.xlu0 %v176, 32
    %v209 = vpop.permute.xlu0 %208
    %210 = vrot.lane.b32.xlu0 %v175, 32
    %v211 = vpop.permute.xlu0 %210
    %212 = vrot.lane.b32.xlu0 %v174, 32
    %v213 = vpop.permute.xlu0 %212
    %214 = vrot.lane.b32.xlu0 %v178, 32
    %v215 = vpop.permute.xlu0 %214
    %226 = vrot.lane.b32.xlu0 %v188, 64
    %v227 = vpop.permute.xlu0 %226
    %228 = vrot.lane.b32.xlu0 %v187, 64
    %v229 = vpop.permute.xlu0 %228
    %230 = vrot.lane.b32.xlu0 %v186, 64
    %v231 = vpop.permute.xlu0 %230
    %232 = vrot.lane.b32.xlu0 %v185, 64
    %v233 = vpop.permute.xlu0 %232
    %234 = vrot.lane.b32.xlu0 %v189, 64
    %v235 = vpop.permute.xlu0 %234
    %246 = vrot.lane.b32.xlu0 %v199, 96
    %v247 = vpop.permute.xlu0 %246
    %248 = vrot.lane.b32.xlu0 %v198, 96
    %v249 = vpop.permute.xlu0 %248
    %250 = vrot.lane.b32.xlu0 %v197, 96
    %v251 = vpop.permute.xlu0 %250
    %252 = vrot.lane.b32.xlu0 %v196, 96
    %v253 = vpop.permute.xlu0 %252
    %254 = vrot.lane.b32.xlu0 %v200, 96
    %v255 = vpop.permute.xlu0 %254
    %vm261 = vcmask 261120
    %v262 = vsel %vm261, %v145, %v207
    %v263 = vsel %vm261, %v148, %v209
    %v264 = vsel %vm261, %v153, %v211
    %v265 = vsel %vm261, %v156, %v213
    %v266 = vsel %vm261, %v161, %v215
    %v267 = vsel %vm100, %v262, %v227
    %v268 = vsel %vm100, %v263, %v229
    %v269 = vsel %vm100, %v264, %v231
    %v270 = vsel %vm100, %v265, %v233
    %v271 = vsel %vm100, %v266, %v235
    %vm272 = vcmask 785408
    %v273 = vsel %vm272, %v267, %v247
    %v274 = vsel %vm272, %v268, %v249
    %v275 = vsel %vm272, %v269, %v251
    %v276 = vsel %vm272, %v270, %v253
    %v277 = vsel %vm272, %v271, %v255
    %v278 = vpack.c.bf16 %v274, %v273
    %v279 = vpack.c.bf16 %v276, %v275
    %v280 = vpack.c.bf16 %v277, %v277
    %v281 = vld [vmem:[%s2] sm:$0xf]
    %v282 = vld [vmem:[%s2 + $0x4] sm:$0xf]
    %v283 = vld [vmem:[%s2 + $0x8] sm:$0xf]
    %v284 = vld [vmem:[%s2 + $0xc] sm:$0xf]
    %v285 = vld [vmem:[%s2 + $0x10] sm:$0xf]
    %v286 = vld [vmem:[%s2 + $0x14] sm:$0xf]
    %v287 = vld [vmem:[%s2 + $0x18] sm:$0xf]
    %v288 = vld [vmem:[%s2 + $0x1c] sm:$0xf]
    %v289 = vld [vmem:[%s2 + $0x20] sm:$0xf]
    %v290 = vld [vmem:[%s2 + $0x24] sm:$0xf]
    %v291 = vld [vmem:[%s2 + $0x28] sm:$0xf]
    %v292 = vld [vmem:[%s2 + $0x2c] sm:$0xf]
    %v293 = vld [vmem:[%s2 + $0x30] sm:$0xf]
    %v294 = vld [vmem:[%s2 + $0x34] sm:$0xf]
    %v295 = vld [vmem:[%s2 + $0x38] sm:$0xf]
    %v296 = vld [vmem:[%s2 + $0x3c] sm:$0xf]
    %v297 = vld [vmem:[%s3] sm:$0x1]
    %v299 = vlaneseq
    %v300 = vshrl.u32 %v299, 7
    %v301 = vsub.s32 0, %v300
    %v302 = vrot.slane %v297, %v301
    %v320 = vunpack.c.l.b16 %v281
    %v321 = vunpack.c.l.b16 %v282
    %v322 = vunpack.c.l.b16 %v283
    %v323 = vunpack.c.l.b16 %v284
    %v324 = vunpack.c.l.b16 %v285
    %v325 = vunpack.c.l.b16 %v286
    %v326 = vunpack.c.l.b16 %v287
    %v327 = vunpack.c.l.b16 %v288
    %v328 = vunpack.c.l.b16 %v289
    %v329 = vunpack.c.l.b16 %v290
    %v330 = vunpack.c.l.b16 %v291
    %v331 = vunpack.c.l.b16 %v292
    %v332 = vunpack.c.l.b16 %v293
    %v333 = vunpack.c.l.b16 %v294
    %v334 = vunpack.c.l.b16 %v295
    %v335 = vunpack.c.l.b16 %v296
    %v336 = vpack.c.b16 %v321, %v320
    %v337 = vpack.c.b16 %v323, %v322
    %v338 = vpack.c.b16 %v325, %v324
    %v339 = vpack.c.b16 %v327, %v326
    %v340 = vpack.c.b16 %v329, %v328
    %v341 = vpack.c.b16 %v331, %v330
    %v342 = vpack.c.b16 %v333, %v332
    %v343 = vpack.c.b16 %v335, %v334
    %352 = vmatprep.subr.bf16.mxu0 0
    %353 = vmatpush1.bf16.msra.mxu0 %v336
    %354 = vmatprep.subr.bf16.mxu0 0
    %355 = vmatpush1.bf16.msra.mxu0 %v337
    %356 = vmatprep.subr.bf16.mxu0 0
    %357 = vmatpush1.bf16.msra.mxu0 %v338
    %358 = vmatprep.subr.bf16.mxu0 0
    %359 = vmatpush1.bf16.msra.mxu0 %v339
    %360 = vmatprep.subr.bf16.mxu0 0
    %361 = vmatpush1.bf16.msra.mxu0 %v340
    %362 = vmatprep.subr.bf16.mxu0 0
    %363 = vmatpush1.bf16.msra.mxu0 %v341
    %364 = vmatprep.subr.bf16.mxu0 0
    %365 = vmatpush1.bf16.msra.mxu0 %v342
    %366 = vmatprep.subr.bf16.mxu0 0
    %367 = vmatpush1.bf16.msra.mxu0 %v343
    %368 = vmatprep.subr.bf16.mxu0 0
    %369 = vmatpush1.bf16.msra.mxu0 0
    %370 = vmatprep.subr.bf16.mxu0 0
    %371 = vmatpush1.bf16.msra.mxu0 0
    %372 = vmatprep.subr.bf16.mxu0 0
    %373 = vmatpush1.bf16.msra.mxu0 0
    %374 = vmatprep.subr.bf16.mxu0 0
    %375 = vmatpush1.bf16.msra.mxu0 0
    %376 = vmatprep.subr.bf16.mxu0 0
    %377 = vmatpush1.bf16.msra.mxu0 0
    %378 = vmatprep.subr.bf16.mxu0 0
    %379 = vmatpush1.bf16.msra.mxu0 0
    %380 = vmatprep.subr.bf16.mxu0 0
    %381 = vmatpush1.bf16.msra.mxu0 0
    %382 = vmatprep.subr.bf16.mxu0 0
    %383 = vmatpush1.bf16.msra.mxu0 0
    %384 = vmatprep.mubr.bf16.mxu0 0
    %385 = vmatmul.mubr.bf16.gmra.mrb[0].mxu0 %v278
    %v386 = vpop.f32.mrb[0].mxu0
    %v387 = vadd.f32 %v302, %v386
    %v388 = vpop.f32.mrb[0].mxu0
    %v389 = vpop.f32.mrb[0].mxu0
    %v390 = vadd.f32 %v302, %v389
    %v391 = vpop.f32.mrb[0].mxu0
    %392 = vmatprep.mubr.bf16.mxu0 0
    %393 = vmatmul.mubr.bf16.gmra.mrb[0].mxu0 %v279
    %v394 = vpop.f32.mrb[0].mxu0
    %v395 = vadd.f32 %v302, %v394
    %v396 = vpop.f32.mrb[0].mxu0
    %v397 = vpop.f32.mrb[0].mxu0
    %v398 = vadd.f32 %v302, %v397
    %v399 = vpop.f32.mrb[0].mxu0
    %400 = vmatprep.mubr.bf16.mxu0 0
    %401 = vmatmul.mubr.bf16.gmra.mrb[0].mxu0 %v280
    %v402 = vpop.f32.mrb[0].mxu0
    %v403 = vpop.f32.mrb[0].mxu0
    %v404 = vpop.f32.mrb[0].mxu0
    %v405 = vpop.f32.mrb[0].mxu0
    %406 = vdwg.mxu0
    %v407 = vmax.f32 %v387, 0.0
    %v408 = vmax.f32 %v390, 0.0
    %v409 = vmax.f32 %v395, 0.0
    %v410 = vmax.f32 %v398, 0.0
    %v411 = vld [vmem:[%s4] sm:$0xff]
    %v412 = vld [vmem:[%s4 + $0x8] sm:$0xff]
    %v413 = vld [vmem:[%s4 + $0x10] sm:$0xff]
    %v414 = vld [vmem:[%s4 + $0x18] sm:$0xff]
    %v415 = vmul.f32 %v407, %v411
    %v416 = vmul.f32 %v408, %v412
    %v417 = vmul.f32 %v409, %v413
    %v418 = vmul.f32 %v410, %v414
    %vm419 = vcmask 392192
    %v420 = vsel %vm419, %v415, -inf
    %v421 = vrot.slane %v420, 4
    %v422 = vmax.f32 %v420, %v421
    %v423 = vrot.slane %v422, 2
    %v424 = vmax.f32 %v422, %v423
    %v425 = vrot.slane %v424, 1
    %v426 = vmax.f32 %v424, %v425
    %v427 = vsel %vm419, %v416, -inf
    %v428 = vrot.slane %v427, 4
    %v429 = vmax.f32 %v427, %v428
    %v430 = vrot.slane %v429, 2
    %v431 = vmax.f32 %v429, %v430
    %v432 = vrot.slane %v431, 1
    %v433 = vmax.f32 %v431, %v432
    %v434 = vsel %vm419, %v417, -inf
    %v435 = vrot.slane %v434, 4
    %v436 = vmax.f32 %v434, %v435
    %v437 = vrot.slane %v436, 2
    %v438 = vmax.f32 %v436, %v437
    %v439 = vrot.slane %v438, 1
    %v440 = vmax.f32 %v438, %v439
    %v441 = vsel %vm419, %v418, -inf
    %v442 = vrot.slane %v441, 4
    %v443 = vmax.f32 %v441, %v442
    %v444 = vrot.slane %v443, 2
    %v445 = vmax.f32 %v443, %v444
    %v446 = vrot.slane %v445, 1
    %v447 = vmax.f32 %v445, %v446
    %vm450 = vcmask 1041409
    %v451 = vsel %vm450, %v433, %v426
    %v455 = vsel %vm450, %v447, %v440
    %456 = vrot.lane.b32.xlu0 %v455, 48
    %v457 = vpop.permute.xlu0 %456
    %v459 = vsel %vm419, %v451, %v457
    %v460 = vld [vmem:[%s5] sm:$0xf]
    %v461 = vld [vmem:[%s5 + $0x4] sm:$0xf]
    %v462 = vld [vmem:[%s5 + $0x8] sm:$0xf]
    %v463 = vld [vmem:[%s5 + $0xc] sm:$0xf]
    %v464 = vld [vmem:[%s5 + $0x10] sm:$0xf]
    %v465 = vld [vmem:[%s5 + $0x14] sm:$0xf]
    %v466 = vld [vmem:[%s5 + $0x18] sm:$0xf]
    %v467 = vld [vmem:[%s5 + $0x1c] sm:$0xf]
    %v468 = vld [vmem:[%s5 + $0x20] sm:$0xf]
    %v469 = vld [vmem:[%s5 + $0x24] sm:$0xf]
    %v470 = vld [vmem:[%s5 + $0x28] sm:$0xf]
    %v471 = vld [vmem:[%s5 + $0x2c] sm:$0xf]
    %v472 = vunpack.c.l.bf16 %v460
    %v473 = vunpack.c.l.bf16 %v461
    %v474 = vunpack.c.l.bf16 %v462
    %v475 = vunpack.c.l.bf16 %v463
    %v476 = vunpack.c.l.bf16 %v464
    %v477 = vunpack.c.l.bf16 %v465
    %v478 = vunpack.c.l.bf16 %v466
    %v479 = vunpack.c.l.bf16 %v467
    %v480 = vunpack.c.l.bf16 %v468
    %v481 = vunpack.c.l.bf16 %v469
    %v482 = vunpack.c.l.bf16 %v470
    %v483 = vunpack.c.l.bf16 %v471
    %v484 = vld [vmem:[%s6] sm:$0x1]
    %v486 = vlaneseq
    %v487 = vshrl.u32 %v486, 7
    %v488 = vsub.s32 0, %v487
    %v489 = vrot.slane %v484, %v488
    %v492 = vsel %vm272, %v459, 0
    %494 = vmatprep.subr.mxu0 0.0
    %495 = vmatpush1.msra.mxu0 %v472
    %496 = vmatprep.subr.mxu0 0.0
    %497 = vmatpush1.msra.mxu0 %v473
    %498 = vmatprep.subr.mxu0 0.0
    %499 = vmatpush1.msra.mxu0 %v474
    %500 = vmatprep.subr.mxu0 0.0
    %501 = vmatpush1.msra.mxu0 %v475
    %502 = vmatprep.subr.mxu0 0.0
    %503 = vmatpush1.msra.mxu0 %v476
    %504 = vmatprep.subr.mxu0 0.0
    %505 = vmatpush1.msra.mxu0 %v477
    %506 = vmatprep.subr.mxu0 0.0
    %507 = vmatpush1.msra.mxu0 %v478
    %508 = vmatprep.subr.mxu0 0.0
    %509 = vmatpush1.msra.mxu0 %v479
    %510 = vmatprep.subr.mxu0 0.0
    %511 = vmatpush1.msra.mxu0 %v480
    %512 = vmatprep.subr.mxu0 0.0
    %513 = vmatpush1.msra.mxu0 %v481
    %514 = vmatprep.subr.mxu0 0.0
    %515 = vmatpush1.msra.mxu0 %v482
    %516 = vmatprep.subr.mxu0 0.0
    %517 = vmatpush1.msra.mxu0 %v483
    %518 = vmatprep.subr.mxu0 0.0
    %519 = vmatpush1.msra.mxu0 0.0
    %520 = vmatprep.subr.mxu0 0.0
    %521 = vmatpush1.msra.mxu0 0.0
    %522 = vmatprep.subr.mxu0 0.0
    %523 = vmatpush1.msra.mxu0 0.0
    %524 = vmatprep.subr.mxu0 0.0
    %525 = vmatpush1.msra.mxu0 0.0
    %526 = vmatprep.subr.mxu0 0.0
    %527 = vmatpush1.msra.mxu0 0.0
    %528 = vmatprep.subr.mxu0 0.0
    %529 = vmatpush1.msra.mxu0 0.0
    %530 = vmatprep.subr.mxu0 0.0
    %531 = vmatpush1.msra.mxu0 0.0
    %532 = vmatprep.subr.mxu0 0.0
    %533 = vmatpush1.msra.mxu0 0.0
    %534 = vmatprep.subr.mxu0 0.0
    %535 = vmatpush1.msra.mxu0 0.0
    %536 = vmatprep.subr.mxu0 0.0
    %537 = vmatpush1.msra.mxu0 0.0
    %538 = vmatprep.subr.mxu0 0.0
    %539 = vmatpush1.msra.mxu0 0.0
    %540 = vmatprep.subr.mxu0 0.0
    %541 = vmatpush1.msra.mxu0 0.0
    %542 = vmatprep.subr.mxu0 0.0
    %543 = vmatpush1.msra.mxu0 0.0
    %544 = vmatprep.subr.mxu0 0.0
    %545 = vmatpush1.msra.mxu0 0.0
    %546 = vmatprep.subr.mxu0 0.0
    %547 = vmatpush1.msra.mxu0 0.0
    %548 = vmatprep.subr.mxu0 0.0
    %549 = vmatpush1.msra.mxu0 0.0
    %550 = vmatprep.subr.mxu0 0.0
    %551 = vmatpush1.msra.mxu0 0.0
    %552 = vmatprep.subr.mxu0 0.0
    %553 = vmatpush1.msra.mxu0 0.0
    %554 = vmatprep.subr.mxu0 0.0
    %555 = vmatpush1.msra.mxu0 0.0
    %556 = vmatprep.subr.mxu0 0.0
    %557 = vmatpush1.msra.mxu0 0.0
    %558 = vmatprep.mubr.f32.mxu0 0.0
    %559 = vmatmul.mubr.f32.gmra.mrb[0].mxu0 %v492
    %v560 = vpop.f32.mrb[0].mxu0
    %v561 = vadd.f32 %v489, %v560
    %v562 = vpop.f32.mrb[0].mxu0
    %563 = vdwg.mxu0
    %564 = vst [vmem:[#allocation2] sm:$0x3] %v561
    // Predicated region
    $region30: #{forward.1} parent=1 // pred_check
      _
    $region31: #{forward.1} parent=1 // pred_check_branch
      %566 = sbr.rel (0) target = $region33
    $region32: #{forward.1} parent=1 // pred_region
      %s568 = ssub.s32 32, 32
      %569 = vsyncadd [#allocation3], %s568
      %s571 = sshll.u32 [#allocation2], 4
      %s572 = int_to_ptr.vmem [resolvable:$true] %s571
      %574 = dma.vmem_to_hbm [thread:$0]  %s572, 32, %s7, [#allocation3]
    $region33: #{forward.1} parent=1 // pred_fallthru
      _
    // Predicated region
    $region34: #{forward.1} parent=1 // pred_check
      _
    $region35: #{forward.1} parent=1 // pred_check_branch
      %576 = sbr.rel (0) target = $region37
    $region36: #{forward.1} parent=1 // pred_region
      %577 = dma.done [#allocation3], 32
    $region37: #{forward.1} parent=1 // pred_fallthru
      _
    %578 = vsyncpa [#allocation3], 1

</llo_original>
